<compile_context>
chip_gen: v6e
topology: v6e:2x2x1
jax: 0.10.0
libtpu: 0.0.40
codegen_flags: <defaults>
</compile_context>

<pallas_src>
import jax
import jax.numpy as jnp
from jax.experimental import pallas as pl
from jax.experimental.pallas import tpu as pltpu

_LANE = 128


def _pos_emb_kernel(x_ref, pos_ref, o_ref):
    # x_ref: (B, chunk); pos_ref: (1, chunk) -> broadcast over the batch (sublane) axis.
    o_ref[...] = (x_ref[...] + pos_ref[...]).astype(o_ref.dtype)


def _round_up(v: int, m: int) -> int:
    return (v + m - 1) // m * m


def positional_embedding(x: jax.Array, pos_emb: jax.Array,
                         *, max_block_bytes: int = 2 * 1024 * 1024) -> jax.Array:
    """x: (B, N, D); pos_emb: (1, N, D). Returns x + pos_emb (broadcast over B)."""
    B, N, D = x.shape
    assert pos_emb.shape == (1, N, D), pos_emb.shape

    # Match the activation dtype (halves pos HBM/VMEM bytes when x is bf16 and makes
    # the in-kernel add/store dtype-exact).
    pos_emb = pos_emb.astype(x.dtype)

    # Flatten (N, D) into one lane-dense axis.
    L = N * D
    xf = x.reshape(B, L)
    pf = pos_emb.reshape(1, L)

    # Lane-align the flattened axis (pads only when N*D is not a multiple of 128).
    L_pad = _round_up(L, _LANE)
    if L_pad != L:
        xf = jnp.pad(xf, ((0, 0), (0, L_pad - L)))
        pf = jnp.pad(pf, ((0, 0), (0, L_pad - L)))

    # Chunk the flattened axis so the x block stays under max_block_bytes:
    # (x + out + pos) blocks x double-buffering then fits the v5e 16 MiB scoped
    # default and v7x's tighter VMEM, while still giving large DMAs per step.
    itemsize = jnp.dtype(x.dtype).itemsize
    max_chunk = max(_LANE,
                    (max_block_bytes // (max(B, 1) * itemsize)) // _LANE * _LANE)
    chunk = min(max_chunk, L_pad)
    num_chunks = pl.cdiv(L_pad, chunk)

    out = pl.pallas_call(
        _pos_emb_kernel,
        out_shape=jax.ShapeDtypeStruct((B, L_pad), x.dtype),
        grid_spec=pltpu.PrefetchScalarGridSpec(
            num_scalar_prefetch=0,
            grid=(num_chunks,),
            in_specs=[
                # Whole batch folded into the block -> pos is streamed exactly once.
                pl.BlockSpec((B, chunk), lambda c: (0, c)),
                pl.BlockSpec((1, chunk), lambda c: (0, c)),
            ],
            out_specs=pl.BlockSpec((B, chunk), lambda c: (0, c)),
        ),
        compiler_params=pltpu.CompilerParams(
            # Chunks are independent -> shard across TensorCores on megacore parts.
            dimension_semantics=("parallel",),
        ),
        # TODO(synk): add input_output_aliases={0: 0} when the caller donates x.
    )(xf, pf)

    if L_pad != L:
        out = out[:, :L]
    return out.reshape(B, N, D)


def init_position_embeddings(key, num_patches: int, embed_dim: int,
                             std: float = 0.02, dtype=jnp.float32) -> jax.Array:
    """Matches nn.init.trunc_normal_(std=0.02): truncated N(0,1) on [-2, 2] * std."""
    vals = jax.random.truncated_normal(
        key, lower=-2.0, upper=2.0, shape=(1, num_patches, embed_dim), dtype=dtype)
    return vals * std


if __name__ == "__main__":
    key = jax.random.PRNGKey(0)
    k_x, k_pos, k_x2, k_pos2 = jax.random.split(key, 4)

    # Case 1: lane-aligned shapes, f32 (batch=2, num_patches=8, embed_dim=32).
    B, N, D = 2, 8, 32
    x = jax.random.normal(k_x, (B, N, D), dtype=jnp.float32)
    pos = init_position_embeddings(k_pos, N, D)
    out = jax.block_until_ready(positional_embedding(x, pos))
    ref = x + pos
    assert out.shape == (B, N, D)
    assert jnp.allclose(out, ref, atol=1e-6), "f32 mismatch vs reference"

    # Case 2: ragged N*D (not a multiple of 128) + bf16 activations (exercises the
    # lane-pad path and the dtype cast of the f32 positional table).
    B2, N2, D2 = 3, 7, 24
    x2 = jax.random.normal(k_x2, (B2, N2, D2), dtype=jnp.bfloat16)
    pos2 = init_position_embeddings(k_pos2, N2, D2)  # f32 table, cast in the wrapper
    out2 = jax.block_until_ready(positional_embedding(x2, pos2))
    ref2 = x2 + pos2.astype(jnp.bfloat16)
    assert out2.shape == (B2, N2, D2)
    assert jnp.allclose(out2.astype(jnp.float32), ref2.astype(jnp.float32),
                        atol=1e-2), "bf16 mismatch vs reference"

    print("KERNEL_OK")
</pallas_src>

<mosaic_0001>
module attributes {stable_mosaic.version = 11 : i64} {
  func.func @_pos_emb_kernel(%arg0: i32, %arg1: memref<2x256xf32, #tpu.memory_space<vmem>>, %arg2: memref<1x256xf32, #tpu.memory_space<vmem>>, %arg3: memref<2x256xf32, #tpu.memory_space<vmem>>) attributes {dimension_semantics = [#tpu.dimension_semantics<parallel>], iteration_bounds = array<i64: 1>, scalar_prefetch = 0 : i64, scratch_operands = 0 : i64, tpu.core_type = #tpu.core_type<tc>, window_params = [{transform_indices = @transform_0, window_bounds = array<i64: 2, 256>}, {transform_indices = @transform_1, window_bounds = array<i64: 1, 256>}, {transform_indices = @transform_2, window_bounds = array<i64: 2, 256>}]} {
    %c0 = arith.constant 0 : index
    %c0_0 = arith.constant 0 : index
    %0 = vector.load %arg1[%c0, %c0_0] : memref<2x256xf32, #tpu.memory_space<vmem>>, vector<2x256xf32>
    %c0_1 = arith.constant 0 : index
    %c0_2 = arith.constant 0 : index
    %1 = vector.load %arg2[%c0_1, %c0_2] : memref<1x256xf32, #tpu.memory_space<vmem>>, vector<1x256xf32>
    %2 = vector.broadcast %1 : vector<1x256xf32> to vector<2x256xf32>
    %3 = arith.addf %0, %2 : vector<2x256xf32>
    %c0_3 = arith.constant 0 : index
    %c0_4 = arith.constant 0 : index
    %4 = vector.load %arg3[%c0_3, %c0_4] : memref<2x256xf32, #tpu.memory_space<vmem>>, vector<2x256xf32>
    tpu.vector_store %arg3[%c0_3, %c0_4], %3 {strides = array<i32>} : memref<2x256xf32, #tpu.memory_space<vmem>>, vector<2x256xf32>,
    return
  }
  func.func @transform_0(%arg0: i32) -> (i32, i32) {
    %c0_i32 = arith.constant 0 : i32
    %c0_i32_0 = arith.constant 0 : i32
    return %c0_i32, %arg0 : i32, i32
  }
  func.func @transform_1(%arg0: i32) -> (i32, i32) {
    %c0_i32 = arith.constant 0 : i32
    %c0_i32_0 = arith.constant 0 : i32
    return %c0_i32, %arg0 : i32, i32
  }
  func.func @transform_2(%arg0: i32) -> (i32, i32) {
    %c0_i32 = arith.constant 0 : i32
    %c0_i32_0 = arith.constant 0 : i32
    return %c0_i32, %arg0 : i32, i32
  }
}

</mosaic_0001>

<llo_original>
// kernel: tpu_custom_call.1
$region0: #{tpu_custom_call.1}
  #allocation0 [shape = 'u32[]', space=smem, size = 0x4, offset = 0x4, fixed_abs, tag = 'smem constant byte address 0x4 - core index']
  #allocation1 [shape = 'u32[144,128]{1,0:T(1,128)}', space=vmem, size = 0x12000, scoped, tag = 'internal scratch']
  %s0 = inlined_call_operand.hbm [shape: f32[2,256], index: 0, kind: input, shape index: {}]
  %s1 = inlined_call_operand.hbm [shape: f32[1,256], index: 1, kind: input, shape index: {}]
  %s2 = inlined_call_operand.hbm [shape: f32[2,256], index: 2, kind: output, shape index: {}]
  %s3 = sld [smem:[#allocation0]]
  $region26: #{tpu_custom_call.1} parent=0
    _
  %s5 = ssub.s32 1, %s3
  %s6 = scalar_select 0, %s5, %s3
  $region1: #{tpu_custom_call.1} parent=0
    #allocation2 [shape = 'u8[2048]{0}', space=vmem, size = 0x800, scoped, tag = 'input window, operand 0, single buffered']
    #allocation3 [shape = 's32[1]{0}', space=sflag, size = 0x4, scoped, tag = 'scoped memory for tpu_custom_call.1']
    #allocation4 [shape = 's32[1]{0}', space=sflag, size = 0x4, scoped, tag = 'scoped memory for tpu_custom_call.1']
    #allocation5 [shape = 'u8[1024]{0}', space=vmem, size = 0x400, scoped, tag = 'input window, operand 1, single buffered']
    #allocation6 [shape = 's32[1]{0}', space=sflag, size = 0x4, scoped, tag = 'scoped memory for tpu_custom_call.1']
    #allocation7 [shape = 'u8[2048]{0}', space=vmem, size = 0x800, scoped, tag = 'output window, operand 0, single buffered']
    %7 = vsyncpa [#allocation3], 0
    %8 = vsyncpa [#allocation6], 0
    %9 = vsyncpa [#allocation4], 0
    // Predicated region
    $region2: #{tpu_custom_call.1} parent=1 // pred_check
      _
    $region3: #{tpu_custom_call.1} parent=1 // pred_check_branch
      %11 = sbr.rel (0) target = $region5
    $region4: #{tpu_custom_call.1} parent=1 // pred_region
      %s13 = ssub.s32 64, 64
      %14 = vsyncadd [#allocation3], %s13
      %s16 = sshll.u32 [#allocation2], 4
      %s17 = int_to_ptr.vmem [resolvable:$true] %s16
      %19 = dma.hbm_to_vmem [thread:$0]  %s0, 64, %s17, [#allocation3]
    $region5: #{tpu_custom_call.1} parent=1 // pred_fallthru
      _
    // Predicated region
    $region6: #{tpu_custom_call.1} parent=1 // pred_check
      _
    $region7: #{tpu_custom_call.1} parent=1 // pred_check_branch
      %21 = sbr.rel (0) target = $region9
    $region8: #{tpu_custom_call.1} parent=1 // pred_region
      %s23 = ssub.s32 32, 32
      %24 = vsyncadd [#allocation6], %s23
      %s26 = sshll.u32 [#allocation5], 4
      %s27 = int_to_ptr.vmem [resolvable:$true] %s26
      %29 = dma.hbm_to_vmem [thread:$0]  %s1, 32, %s27, [#allocation6]
    $region9: #{tpu_custom_call.1} parent=1 // pred_fallthru
      _
    // Predicated region
    $region10: #{tpu_custom_call.1} parent=1 // pred_check
      _
    $region11: #{tpu_custom_call.1} parent=1 // pred_check_branch
      %31 = sbr.rel (0) target = $region13
    $region12: #{tpu_custom_call.1} parent=1 // pred_region
      %32 = dma.done [#allocation3], 64
    $region13: #{tpu_custom_call.1} parent=1 // pred_fallthru
      _
    // Predicated region
    $region14: #{tpu_custom_call.1} parent=1 // pred_check
      _
    $region15: #{tpu_custom_call.1} parent=1 // pred_check_branch
      %34 = sbr.rel (0) target = $region17
    $region16: #{tpu_custom_call.1} parent=1 // pred_region
      %35 = dma.done [#allocation6], 32
    $region17: #{tpu_custom_call.1} parent=1 // pred_fallthru
      _
    %v36 = vld [vmem:[#allocation2] sm:$0xf]
    %v37 = vld [vmem:[#allocation5] sm:$0x3]
    %v39 = vlaneseq
    %v40 = vshrl.u32 %v39, 7
    %v41 = vsub.s32 0, %v40
    %v42 = vrot.slane %v37, %v41
    %v43 = vlaneseq
    %v44 = vshrl.u32 %v43, 7
    %v45 = vsub.s32 1, %v44
    %v46 = vrot.slane %v37, %v45
    %v47 = vcombine.low %v42, %v46
    %v49 = vunpack.c.l.s4 1983009808
    %v50 = vunpack.c.0.s8 %v49
    %v51 = vlaneseq
    %v52 = vshrl.u32 %v51, 7
    %v53 = vsub.s32 %v50, %v52
    %v54 = vrot.slane %v47, %v53
    %v56 = vadd.f32 %v36, %v54
    %57 = vst [vmem:[#allocation7] sm:$0xf] %v56
    // Predicated region
    $region18: #{tpu_custom_call.1} parent=1 // pred_check
      _
    $region19: #{tpu_custom_call.1} parent=1 // pred_check_branch
      %59 = sbr.rel (0) target = $region21
    $region20: #{tpu_custom_call.1} parent=1 // pred_region
      %s61 = ssub.s32 64, 64
      %62 = vsyncadd [#allocation4], %s61
      %s64 = sshll.u32 [#allocation7], 4
      %s65 = int_to_ptr.vmem [resolvable:$true] %s64
      %67 = dma.vmem_to_hbm [thread:$0]  %s65, 64, %s2, [#allocation4]
    $region21: #{tpu_custom_call.1} parent=1 // pred_fallthru
      _
    // Predicated region
    $region22: #{tpu_custom_call.1} parent=1 // pred_check
      _
    $region23: #{tpu_custom_call.1} parent=1 // pred_check_branch
      %69 = sbr.rel (0) target = $region25
    $region24: #{tpu_custom_call.1} parent=1 // pred_region
      %70 = dma.done [#allocation4], 64
    $region25: #{tpu_custom_call.1} parent=1 // pred_fallthru
      _
    %71 = vsyncpa [#allocation3], 1
    %72 = vsyncpa [#allocation6], 1
    %73 = vsyncpa [#allocation4], 1

</llo_original>
